<compile_context>
chip_gen: v5e
topology: v5e:2x2
jax: 0.10.0
libtpu: 0.0.40
codegen_flags: <defaults>
</compile_context>

<pallas_src>
import jax
import jax.numpy as jnp
from jax.experimental import pallas as pl
from jax.experimental.pallas import tpu as pltpu


def _round_up(n, m):
    return ((n + m - 1) // m) * m


def _pad2(a, rows, cols):
    r, c = a.shape
    if r == rows and c == cols:
        return a
    return jnp.pad(a, ((0, rows - r), (0, cols - c)))


def _mlp_kernel(x_ref, w1_ref, b1_ref, w2_ref, b2_ref, w3_ref, b3_ref, o_ref):
    # x arrives pre-cast to bf16 from the wrapper (no in-kernel cast).
    x = x_ref[...]                                       # (TB, Din) bf16

    # layer 1: (TB, Din) @ (Din, 384) + (1, 384), ReLU   — f32 accumulate
    h1 = jnp.dot(x, w1_ref[...], preferred_element_type=jnp.float32)
    h1 = jnp.maximum(h1 + b1_ref[...], 0.0)

    # layer 2: (TB, 384) @ (384, 128) + (1, 128), ReLU
    h2 = jnp.dot(h1.astype(jnp.bfloat16), w2_ref[...],
                 preferred_element_type=jnp.float32)
    h2 = jnp.maximum(h2 + b2_ref[...], 0.0)

    # output layer: (TB, 128) @ (128, Dout) + (1, Dout)
    out = jnp.dot(h2.astype(jnp.bfloat16), w3_ref[...],
                  preferred_element_type=jnp.float32)
    o_ref[...] = (out + b3_ref[...]).astype(o_ref.dtype)


def _pick_batch_tiling(B, tb):
    """Pick (tb_eff, Bp, grid) s.t. tb_eff % 16 == 0 (bf16 sublane packing),
    grid >= 2 when the batch allows it (v7x: 2 TensorCores), and batch
    padding waste is at most ~16 rows per tile."""
    B16 = _round_up(max(B, 1), 16)
    n = pl.cdiv(B16, tb)
    if n < 2 and B16 >= 32:
        n = 2                      # keep both v7x TensorCores busy
    tb_eff = _round_up(pl.cdiv(B16, n), 16)
    Bp = n * tb_eff
    return tb_eff, Bp, n


def lenet300_100_regress(x, params, *, tb=1024, out_dtype=jnp.float32):
    """Forward pass. x: (B, i_dim). params: dict of (in,out) weights, (1,out) biases."""
    B, i_dim = x.shape
    o_dim = params["w3"].shape[1]

    # Lane-aligned padded feature dims (dense MXU tiles, lane-dense stores).
    Din = _round_up(max(i_dim, 1), 128)
    H1 = 384           # 300 -> 384
    H2 = 128           # 100 -> 128
    Dout = _round_up(max(o_dim, 1), 128)

    # Zero-padded, MXU-friendly parameters (weights bf16, biases f32).
    # Zero padding is numerically inert through bias-add / ReLU.
    w1 = _pad2(params["w1"], Din, H1).astype(jnp.bfloat16)
    w2 = _pad2(params["w2"], H1, H2).astype(jnp.bfloat16)
    w3 = _pad2(params["w3"], H2, Dout).astype(jnp.bfloat16)
    b1 = _pad2(params["b1"].astype(jnp.float32), 1, H1)
    b2 = _pad2(params["b2"].astype(jnp.float32), 1, H2)
    b3 = _pad2(params["b3"].astype(jnp.float32), 1, Dout)

    tb_eff, Bp, grid = _pick_batch_tiling(B, tb)

    # Fused pad + bf16 cast of x (single pass); fast path skips the pad
    # entirely when the batch and feature dims are already aligned.
    if B == Bp and i_dim == Din:
        xp = x if x.dtype == jnp.bfloat16 else x.astype(jnp.bfloat16)
    else:
        xp = _pad2(x, Bp, Din).astype(jnp.bfloat16)

    resident = lambda i: (0, 0)   # weights/biases: same block every step -> stay VMEM-resident

    out_padded = pl.pallas_call(
        _mlp_kernel,
        out_shape=jax.ShapeDtypeStruct((Bp, Dout), out_dtype),
        grid_spec=pltpu.PrefetchScalarGridSpec(
            num_scalar_prefetch=0,
            grid=(grid,),
            in_specs=[
                pl.BlockSpec((tb_eff, Din), lambda i: (i, 0)),   # x tile (bf16)
                pl.BlockSpec((Din, H1), resident),               # w1
                pl.BlockSpec((1, H1), resident),                 # b1
                pl.BlockSpec((H1, H2), resident),                # w2
                pl.BlockSpec((1, H2), resident),                 # b2
                pl.BlockSpec((H2, Dout), resident),              # w3
                pl.BlockSpec((1, Dout), resident),               # b3
            ],
            out_specs=pl.BlockSpec((tb_eff, Dout), lambda i: (i, 0)),
        ),
        compiler_params=pltpu.CompilerParams(
            dimension_semantics=("parallel",)),
    )(xp, w1, b1, w2, b2, w3, b3)

    # Fast path: skip the slice when nothing was padded.
    if B == Bp and o_dim == Dout:
        return out_padded
    return out_padded[:B, :o_dim]


def init_params(key, i_dim, o_dim):
    """PyTorch nn.Linear-style init (uniform +/- 1/sqrt(fan_in)).
    Weights stored pre-transposed as (in, out); biases as (1, out)."""
    def linear(k, fan_in, fan_out):
        kw, kb = jax.random.split(k)
        bound = 1.0 / jnp.sqrt(jnp.float32(fan_in))
        w = jax.random.uniform(kw, (fan_in, fan_out), jnp.float32, -bound, bound)
        b = jax.random.uniform(kb, (1, fan_out), jnp.float32, -bound, bound)
        return w, b

    k1, k2, k3 = jax.random.split(key, 3)
    w1, b1 = linear(k1, i_dim, 300)
    w2, b2 = linear(k2, 300, 100)
    w3, b3 = linear(k3, 100, o_dim)
    return {"w1": w1, "b1": b1, "w2": w2, "b2": b2, "w3": w3, "b3": b3}


def _reference(x, params):
    h1 = jnp.maximum(x @ params["w1"] + params["b1"], 0.0)
    h2 = jnp.maximum(h1 @ params["w2"] + params["b2"], 0.0)
    return h2 @ params["w3"] + params["b3"]


if __name__ == "__main__":
    key = jax.random.PRNGKey(0)
    k_param, k_x, k_param2, k_x2 = jax.random.split(key, 4)

    # Case 1: aligned-ish small shapes -> 2 grid steps (exercises the parallel
    # batch grid / both-TC path), 128-aligned i_dim fast path on the input.
    B, i_dim, o_dim = 64, 128, 4
    params = init_params(k_param, i_dim, o_dim)
    x = jax.random.normal(k_x, (B, i_dim), dtype=jnp.float32)
    out = jax.block_until_ready(lenet300_100_regress(x, params))
    assert out.shape == (B, o_dim) and out.dtype == jnp.float32
    assert bool(jnp.all(jnp.isfinite(out)))
    ref = _reference(x, params)
    assert float(jnp.max(jnp.abs(out - ref))) < 0.1  # bf16 MXU vs f32 reference

    # Case 2: unaligned batch / feature / output dims -> exercises pad + slice path.
    B2, i_dim2, o_dim2 = 20, 100, 3
    params2 = init_params(k_param2, i_dim2, o_dim2)
    x2 = jax.random.normal(k_x2, (B2, i_dim2), dtype=jnp.float32)
    out2 = jax.block_until_ready(lenet300_100_regress(x2, params2))
    assert out2.shape == (B2, o_dim2) and out2.dtype == jnp.float32
    ref2 = _reference(x2, params2)
    assert float(jnp.max(jnp.abs(out2 - ref2))) < 0.1

    print("KERNEL_OK")
</pallas_src>

<mosaic_0001>
module attributes {stable_mosaic.version = 11 : i64} {
  func.func @_mlp_kernel(%arg0: i32, %arg1: memref<32x128xbf16, #tpu.memory_space<vmem>>, %arg2: memref<128x384xbf16, #tpu.memory_space<vmem>>, %arg3: memref<1x384xf32, #tpu.memory_space<vmem>>, %arg4: memref<384x128xbf16, #tpu.memory_space<vmem>>, %arg5: memref<1x128xf32, #tpu.memory_space<vmem>>, %arg6: memref<128x128xbf16, #tpu.memory_space<vmem>>, %arg7: memref<1x128xf32, #tpu.memory_space<vmem>>, %arg8: memref<32x128xf32, #tpu.memory_space<vmem>>) attributes {dimension_semantics = [#tpu.dimension_semantics<parallel>], iteration_bounds = array<i64: 2>, scalar_prefetch = 0 : i64, scratch_operands = 0 : i64, tpu.core_type = #tpu.core_type<tc>, window_params = [{transform_indices = @transform_0, window_bounds = array<i64: 32, 128>}, {pipeline_mode = #tpu.pipeline_mode<synchronous>, transform_indices = @transform_1, window_bounds = array<i64: 128, 384>}, {pipeline_mode = #tpu.pipeline_mode<synchronous>, transform_indices = @transform_2, window_bounds = array<i64: 1, 384>}, {pipeline_mode = #tpu.pipeline_mode<synchronous>, transform_indices = @transform_3, window_bounds = array<i64: 384, 128>}, {pipeline_mode = #tpu.pipeline_mode<synchronous>, transform_indices = @transform_4, window_bounds = array<i64: 1, 128>}, {pipeline_mode = #tpu.pipeline_mode<synchronous>, transform_indices = @transform_5, window_bounds = array<i64: 128, 128>}, {pipeline_mode = #tpu.pipeline_mode<synchronous>, transform_indices = @transform_6, window_bounds = array<i64: 1, 128>}, {transform_indices = @transform_7, window_bounds = array<i64: 32, 128>}]} {
    %c0 = arith.constant 0 : index
    %c0_0 = arith.constant 0 : index
    %0 = vector.load %arg1[%c0, %c0_0] : memref<32x128xbf16, #tpu.memory_space<vmem>>, vector<32x128xbf16>
    %c0_1 = arith.constant 0 : index
    %c0_2 = arith.constant 0 : index
    %1 = vector.load %arg2[%c0_1, %c0_2] : memref<128x384xbf16, #tpu.memory_space<vmem>>, vector<128x384xbf16>
    %cst = arith.constant dense<0.000000e+00> : vector<32x384xf32>
    %2 = tpu.matmul %0, %1, %cst {dimension_numbers = #tpu.dot_dimension_numbers<[1], [0], [0], [1], [0, 0, 1, 1], [], []>} : vector<32x128xbf16>, vector<128x384xbf16>, vector<32x384xf32> -> vector<32x384xf32>
    %c0_3 = arith.constant 0 : index
    %c0_4 = arith.constant 0 : index
    %3 = vector.load %arg3[%c0_3, %c0_4] : memref<1x384xf32, #tpu.memory_space<vmem>>, vector<1x384xf32>
    %4 = vector.broadcast %3 : vector<1x384xf32> to vector<32x384xf32>
    %5 = arith.addf %2, %4 : vector<32x384xf32>
    %cst_5 = arith.constant 0.000000e+00 : f32
    %6 = vector.broadcast %cst_5 : f32 to vector<32x384xf32>
    %7 = arith.maximumf %5, %6 : vector<32x384xf32>
    %8 = arith.truncf %7 : vector<32x384xf32> to vector<32x384xbf16>
    %c0_6 = arith.constant 0 : index
    %c0_7 = arith.constant 0 : index
    %9 = vector.load %arg4[%c0_6, %c0_7] : memref<384x128xbf16, #tpu.memory_space<vmem>>, vector<384x128xbf16>
    %cst_8 = arith.constant dense<0.000000e+00> : vector<32x128xf32>
    %10 = tpu.matmul %8, %9, %cst_8 {dimension_numbers = #tpu.dot_dimension_numbers<[1], [0], [0], [1], [0, 0, 1, 1], [], []>} : vector<32x384xbf16>, vector<384x128xbf16>, vector<32x128xf32> -> vector<32x128xf32>
    %c0_9 = arith.constant 0 : index
    %c0_10 = arith.constant 0 : index
    %11 = vector.load %arg5[%c0_9, %c0_10] : memref<1x128xf32, #tpu.memory_space<vmem>>, vector<1x128xf32>
    %12 = vector.broadcast %11 : vector<1x128xf32> to vector<32x128xf32>
    %13 = arith.addf %10, %12 : vector<32x128xf32>
    %cst_11 = arith.constant 0.000000e+00 : f32
    %14 = vector.broadcast %cst_11 : f32 to vector<32x128xf32>
    %15 = arith.maximumf %13, %14 : vector<32x128xf32>
    %16 = arith.truncf %15 : vector<32x128xf32> to vector<32x128xbf16>
    %c0_12 = arith.constant 0 : index
    %c0_13 = arith.constant 0 : index
    %17 = vector.load %arg6[%c0_12, %c0_13] : memref<128x128xbf16, #tpu.memory_space<vmem>>, vector<128x128xbf16>
    %cst_14 = arith.constant dense<0.000000e+00> : vector<32x128xf32>
    %18 = tpu.matmul %16, %17, %cst_14 {dimension_numbers = #tpu.dot_dimension_numbers<[1], [0], [0], [1], [0, 0, 1, 1], [], []>} : vector<32x128xbf16>, vector<128x128xbf16>, vector<32x128xf32> -> vector<32x128xf32>
    %c0_15 = arith.constant 0 : index
    %c0_16 = arith.constant 0 : index
    %19 = vector.load %arg7[%c0_15, %c0_16] : memref<1x128xf32, #tpu.memory_space<vmem>>, vector<1x128xf32>
    %20 = vector.broadcast %19 : vector<1x128xf32> to vector<32x128xf32>
    %21 = arith.addf %18, %20 : vector<32x128xf32>
    %c0_17 = arith.constant 0 : index
    %c0_18 = arith.constant 0 : index
    %22 = vector.load %arg8[%c0_17, %c0_18] : memref<32x128xf32, #tpu.memory_space<vmem>>, vector<32x128xf32>
    tpu.vector_store %arg8[%c0_17, %c0_18], %21 {strides = array<i32>} : memref<32x128xf32, #tpu.memory_space<vmem>>, vector<32x128xf32>,
    return
  }
  func.func @transform_0(%arg0: i32) -> (i32, i32) {
    %c0_i32 = arith.constant 0 : i32
    %c0_i32_0 = arith.constant 0 : i32
    return %arg0, %c0_i32 : i32, i32
  }
  func.func @transform_1(%arg0: i32) -> (i32, i32) {
    %c0_i32 = arith.constant 0 : i32
    %c0_i32_0 = arith.constant 0 : i32
    %c0_i32_1 = arith.constant 0 : i32
    return %c0_i32, %c0_i32_0 : i32, i32
  }
  func.func @transform_2(%arg0: i32) -> (i32, i32) {
    %c0_i32 = arith.constant 0 : i32
    %c0_i32_0 = arith.constant 0 : i32
    %c0_i32_1 = arith.constant 0 : i32
    return %c0_i32, %c0_i32_0 : i32, i32
  }
  func.func @transform_3(%arg0: i32) -> (i32, i32) {
    %c0_i32 = arith.constant 0 : i32
    %c0_i32_0 = arith.constant 0 : i32
    %c0_i32_1 = arith.constant 0 : i32
    return %c0_i32, %c0_i32_0 : i32, i32
  }
  func.func @transform_4(%arg0: i32) -> (i32, i32) {
    %c0_i32 = arith.constant 0 : i32
    %c0_i32_0 = arith.constant 0 : i32
    %c0_i32_1 = arith.constant 0 : i32
    return %c0_i32, %c0_i32_0 : i32, i32
  }
  func.func @transform_5(%arg0: i32) -> (i32, i32) {
    %c0_i32 = arith.constant 0 : i32
    %c0_i32_0 = arith.constant 0 : i32
    %c0_i32_1 = arith.constant 0 : i32
    return %c0_i32, %c0_i32_0 : i32, i32
  }
  func.func @transform_6(%arg0: i32) -> (i32, i32) {
    %c0_i32 = arith.constant 0 : i32
    %c0_i32_0 = arith.constant 0 : i32
    %c0_i32_1 = arith.constant 0 : i32
    return %c0_i32, %c0_i32_0 : i32, i32
  }
  func.func @transform_7(%arg0: i32) -> (i32, i32) {
    %c0_i32 = arith.constant 0 : i32
    %c0_i32_0 = arith.constant 0 : i32
    return %arg0, %c0_i32 : i32, i32
  }
}

</mosaic_0001>

<llo_original>
// kernel: tpu_custom_call.1
$region0: #{tpu_custom_call.1}
  #allocation0 [shape = 'u32[]', space=smem, size = 0x4, offset = 0x4, fixed_abs, tag = 'smem constant byte address 0x4 - core index']
  #allocation1 [shape = 'u32[72,128]{1,0:T(1,128)}', space=vmem, size = 0x9000, scoped, tag = 'internal scratch']
  %s0 = inlined_call_operand.hbm [shape: bf16[64,128], index: 0, kind: input, shape index: {}]
  %s1 = inlined_call_operand.hbm [shape: bf16[128,384], index: 1, kind: input, shape index: {}]
  %s2 = inlined_call_operand.hbm [shape: f32[1,384], index: 2, kind: input, shape index: {}]
  %s3 = inlined_call_operand.hbm [shape: bf16[384,128], index: 3, kind: input, shape index: {}]
  %s4 = inlined_call_operand.vmem [shape: f32[1,128], index: 4, kind: input, shape index: {}]
  %s5 = inlined_call_operand.hbm [shape: bf16[128,128], index: 5, kind: input, shape index: {}]
  %s6 = inlined_call_operand.vmem [shape: f32[1,128], index: 6, kind: input, shape index: {}]
  %s7 = inlined_call_operand.hbm [shape: f32[64,128], index: 7, kind: output, shape index: {}]
  %s8 = sld [smem:[#allocation0]]
  $region81: #{tpu_custom_call.1} parent=0
    _
  %s10 = ssub.s32 1, %s8
  %s11 = scalar_select 0, %s10, %s8
  $region1: #{tpu_custom_call.1} parent=0
    #allocation2 [shape = 'u8[16384]{0}', space=vmem, size = 0x4000, scoped, tag = 'input window, operand 0']
    #allocation3 [shape = 's32[2]{0}', space=sflag, size = 0x8, scoped, tag = 'scoped memory for tpu_custom_call.1']
    #allocation4 [shape = 's32[2]{0}', space=sflag, size = 0x8, scoped, tag = 'scoped memory for tpu_custom_call.1']
    #allocation5 [shape = 'u8[98304]{0}', space=vmem, size = 0x18000, scoped, tag = 'input window, operand 1, single buffered']
    #allocation6 [shape = 's32[1]{0}', space=sflag, size = 0x4, scoped, tag = 'scoped memory for tpu_custom_call.1']
    #allocation7 [shape = 'u8[1536]{0}', space=vmem, size = 0x800, scoped, tag = 'input window, operand 2, single buffered']
    #allocation8 [shape = 'u8[98304]{0}', space=vmem, size = 0x18000, scoped, tag = 'input window, operand 3, single buffered']
    #allocation9 [shape = 's32[1]{0}', space=sflag, size = 0x4, scoped, tag = 'scoped memory for tpu_custom_call.1']
    #allocation10 [shape = 'u8[32768]{0}', space=vmem, size = 0x8000, scoped, tag = 'input window, operand 5, single buffered']
    #allocation11 [shape = 'u8[32768]{0}', space=vmem, size = 0x8000, scoped, tag = 'output window, operand 0']
    %12 = vsyncpa [#allocation3], 0
    %s13 = scalar_lea.sflag [#allocation3], 1
    %14 = vsyncpa %s13, 0
    %15 = vsyncpa [#allocation6], 0
    %16 = vsyncpa [#allocation9], 0
    %17 = vsyncpa [#allocation4], 0
    %s18 = scalar_lea.sflag [#allocation4], 1
    %19 = vsyncpa %s18, 0
    loop: start=0, step=1, limit=4
    $region2: #{tpu_custom_call.1} parent=1 // loop_pre_header
      _
    $region3: #{tpu_custom_call.1} parent=1 // loop_header
      %s21 = sphi 0, %s25
      %p22 = scmp.ge.s32.totalorder %s21, 4
      %s31 = sphi 0, %s33
      %s34 = sphi 0, %s31
      %s35 = sphi 0, %s34
      %s51 = sphi 0, %s35
      %s55 = sphi 0, %s55
      %s57 = sphi 0, %s55
      %s58 = sphi 0, %s57
      %s72 = sphi 0, %s58
      %s76 = sphi 0, %s76
      %s78 = sphi 0, %s76
      %s79 = sphi 0, %s78
      %s93 = sphi 0, %s79
      %s97 = sphi 0, %s97
      %s99 = sphi 0, %s97
      %s100 = sphi 0, %s99
      %s114 = sphi 0, %s100
      %s118 = sphi 0, %s118
      %s120 = sphi 0, %s118
      %s121 = sphi 0, %s120
      %s135 = sphi 0, %s121
      %s139 = sphi 0, %s139
      %s141 = sphi 0, %s139
      %s142 = sphi 0, %s141
      %s156 = sphi 0, %s142
      %s160 = sphi 0, %s160
      %s162 = sphi 0, %s160
      %s163 = sphi 0, %s162
      %s177 = sphi 0, %s163
      %s183 = sphi 0, %s185
      %s186 = sphi 0, %s183
      %s187 = sphi 0, %s186
      %s203 = sphi 0, %s187
    $region4: #{tpu_custom_call.1} parent=1 // loop_header_branch
      %24 = sbr.rel (%p22) target = $region8
    $region5: #{tpu_custom_call.1} parent=1 // loop_body
      %s26 = ssub.s32 %s21, 1
      %s27 = ssub.s32 %s21, 2
      %s28 = sadd.s32 %s21, 1
      %s29 = ssub.s32 %s21, %s28
      %p30 = scmp.eq.s32.totalorder %s29, 0
      %s32 = sadd.s32 %s31, 1
      %s33 = scalar_select %p30, %s31, %s32
      %p36 = pneg %p30
      %p37 = scmp.eq.s32.totalorder %s21, 1
      %p38 = por %p36, %p37
      %p39 = scmp.ne.s32.totalorder %s31, %s34
      %p40 = scmp.eq.s32.totalorder %s21, 0
      %p41 = por %p39, %p40
      %p42 = scmp.ne.s32.totalorder %s31, %s34
      %p43 = scmp.eq.s32.totalorder %s26, 1
      %p44 = por %p42, %p43
      %p45 = scmp.ne.s32.totalorder %s34, %s35
      %p46 = scmp.eq.s32.totalorder %s26, 0
      %p47 = por %p45, %p46
      %p48 = scmp.ne.s32.totalorder %s34, %s35
      %p49 = scmp.eq.s32.totalorder %s27, 1
      %p50 = por %p48, %p49
      %p52 = scmp.ne.s32.totalorder %s35, %s51
      %p53 = scmp.eq.s32.totalorder %s27, 0
      %p54 = por %p52, %p53
      %s56 = sadd.s32 %s55, 1
      %p59 = scmp.eq.s32.totalorder %s21, 1
      %p60 = scmp.ne.s32.totalorder %s55, %s57
      %p61 = scmp.eq.s32.totalorder %s21, 0
      %p62 = por %p60, %p61
      %p63 = scmp.ne.s32.totalorder %s55, %s57
      %p64 = scmp.eq.s32.totalorder %s26, 1
      %p65 = por %p63, %p64
      %p66 = scmp.ne.s32.totalorder %s57, %s58
      %p67 = scmp.eq.s32.totalorder %s26, 0
      %p68 = por %p66, %p67
      %p69 = scmp.ne.s32.totalorder %s57, %s58
      %p70 = scmp.eq.s32.totalorder %s27, 1
      %p71 = por %p69, %p70
      %p73 = scmp.ne.s32.totalorder %s58, %s72
      %p74 = scmp.eq.s32.totalorder %s27, 0
      %p75 = por %p73, %p74
      %s77 = sadd.s32 %s76, 1
      %p80 = scmp.eq.s32.totalorder %s21, 1
      %p81 = scmp.ne.s32.totalorder %s76, %s78
      %p82 = scmp.eq.s32.totalorder %s21, 0
      %p83 = por %p81, %p82
      %p84 = scmp.ne.s32.totalorder %s76, %s78
      %p85 = scmp.eq.s32.totalorder %s26, 1
      %p86 = por %p84, %p85
      %p87 = scmp.ne.s32.totalorder %s78, %s79
      %p88 = scmp.eq.s32.totalorder %s26, 0
      %p89 = por %p87, %p88
      %p90 = scmp.ne.s32.totalorder %s78, %s79
      %p91 = scmp.eq.s32.totalorder %s27, 1
      %p92 = por %p90, %p91
      %p94 = scmp.ne.s32.totalorder %s79, %s93
      %p95 = scmp.eq.s32.totalorder %s27, 0
      %p96 = por %p94, %p95
      %s98 = sadd.s32 %s97, 1
      %p101 = scmp.eq.s32.totalorder %s21, 1
      %p102 = scmp.ne.s32.totalorder %s97, %s99
      %p103 = scmp.eq.s32.totalorder %s21, 0
      %p104 = por %p102, %p103
      %p105 = scmp.ne.s32.totalorder %s97, %s99
      %p106 = scmp.eq.s32.totalorder %s26, 1
      %p107 = por %p105, %p106
      %p108 = scmp.ne.s32.totalorder %s99, %s100
      %p109 = scmp.eq.s32.totalorder %s26, 0
      %p110 = por %p108, %p109
      %p111 = scmp.ne.s32.totalorder %s99, %s100
      %p112 = scmp.eq.s32.totalorder %s27, 1
      %p113 = por %p111, %p112
      %p115 = scmp.ne.s32.totalorder %s100, %s114
      %p116 = scmp.eq.s32.totalorder %s27, 0
      %p117 = por %p115, %p116
      %s119 = sadd.s32 %s118, 1
      %p122 = scmp.eq.s32.totalorder %s21, 1
      %p123 = scmp.ne.s32.totalorder %s118, %s120
      %p124 = scmp.eq.s32.totalorder %s21, 0
      %p125 = por %p123, %p124
      %p126 = scmp.ne.s32.totalorder %s118, %s120
      %p127 = scmp.eq.s32.totalorder %s26, 1
      %p128 = por %p126, %p127
      %p129 = scmp.ne.s32.totalorder %s120, %s121
      %p130 = scmp.eq.s32.totalorder %s26, 0
      %p131 = por %p129, %p130
      %p132 = scmp.ne.s32.totalorder %s120, %s121
      %p133 = scmp.eq.s32.totalorder %s27, 1
      %p134 = por %p132, %p133
      %p136 = scmp.ne.s32.totalorder %s121, %s135
      %p137 = scmp.eq.s32.totalorder %s27, 0
      %p138 = por %p136, %p137
      %s140 = sadd.s32 %s139, 1
      %p143 = scmp.eq.s32.totalorder %s21, 1
      %p144 = scmp.ne.s32.totalorder %s139, %s141
      %p145 = scmp.eq.s32.totalorder %s21, 0
      %p146 = por %p144, %p145
      %p147 = scmp.ne.s32.totalorder %s139, %s141
      %p148 = scmp.eq.s32.totalorder %s26, 1
      %p149 = por %p147, %p148
      %p150 = scmp.ne.s32.totalorder %s141, %s142
      %p151 = scmp.eq.s32.totalorder %s26, 0
      %p152 = por %p150, %p151
      %p153 = scmp.ne.s32.totalorder %s141, %s142
      %p154 = scmp.eq.s32.totalorder %s27, 1
      %p155 = por %p153, %p154
      %p157 = scmp.ne.s32.totalorder %s142, %s156
      %p158 = scmp.eq.s32.totalorder %s27, 0
      %p159 = por %p157, %p158
      %s161 = sadd.s32 %s160, 1
      %p164 = scmp.eq.s32.totalorder %s21, 1
      %p165 = scmp.ne.s32.totalorder %s160, %s162
      %p166 = scmp.eq.s32.totalorder %s21, 0
      %p167 = por %p165, %p166
      %p168 = scmp.ne.s32.totalorder %s160, %s162
      %p169 = scmp.eq.s32.totalorder %s26, 1
      %p170 = por %p168, %p169
      %p171 = scmp.ne.s32.totalorder %s162, %s163
      %p172 = scmp.eq.s32.totalorder %s26, 0
      %p173 = por %p171, %p172
      %p174 = scmp.ne.s32.totalorder %s162, %s163
      %p175 = scmp.eq.s32.totalorder %s27, 1
      %p176 = por %p174, %p175
      %p178 = scmp.ne.s32.totalorder %s163, %s177
      %p179 = scmp.eq.s32.totalorder %s27, 0
      %p180 = por %p178, %p179
      %s181 = ssub.s32 %s21, %s28
      %p182 = scmp.eq.s32.totalorder %s181, 0
      %s184 = sadd.s32 %s183, 1
      %s185 = scalar_select %p182, %s183, %s184
      %p188 = pneg %p182
      %p189 = scmp.eq.s32.totalorder %s21, 1
      %p190 = por %p188, %p189
      %p191 = scmp.ne.s32.totalorder %s183, %s186
      %p192 = scmp.eq.s32.totalorder %s21, 0
      %p193 = por %p191, %p192
      %p194 = scmp.ne.s32.totalorder %s183, %s186
      %p195 = scmp.eq.s32.totalorder %s26, 1
      %p196 = por %p194, %p195
      %p197 = scmp.ne.s32.totalorder %s186, %s187
      %p198 = scmp.eq.s32.totalorder %s26, 0
      %p199 = por %p197, %p198
      %p200 = scmp.ne.s32.totalorder %s186, %s187
      %p201 = scmp.eq.s32.totalorder %s27, 1
      %p202 = por %p200, %p201
      %p204 = scmp.ne.s32.totalorder %s187, %s203
      %p205 = scmp.eq.s32.totalorder %s27, 0
      %p206 = por %p204, %p205
      %p207 = scmp.le.s32.totalorder 1, %s21
      %p208 = scmp.lt.s32.totalorder %s21, 3
      %p209 = pnand %p207, %p208
      %p210 = pneg %p209
      // Predicated region
      $region9: #{tpu_custom_call.1} parent=5 // pred_check
        _
      $region10: #{tpu_custom_call.1} parent=5 // pred_check_branch
        %212 = sbr.rel (%p209) target = $region12
      $region11: #{tpu_custom_call.1} parent=5 // pred_region
        %s213 = ssub.s32 %s21, 1
        // Predicated region
        $region13: #{tpu_custom_call.1} parent=11 // pred_check
          %p214 = pneg %p68
        $region14: #{tpu_custom_call.1} parent=11 // pred_check_branch
          %216 = sbr.rel (%p214) target = $region16
        $region15: #{tpu_custom_call.1} parent=11 // pred_region
          %218 = vsyncadd [#allocation6], 0
          %s219 = sshll.u32 %s1, 4
          %s220 = int_to_ptr.hbm [resolvable:$true] %s219
          %s221 = sshll.u32 [#allocation5], 4
          %s222 = int_to_ptr.vmem [resolvable:$true] %s221
          %227 = dma.hbm_to_vmem [thread:$0]  %s220, 3072, %s222, [#allocation6], 192, 192, 12
        $region16: #{tpu_custom_call.1} parent=11 // pred_fallthru
          _
        // Predicated region
        $region17: #{tpu_custom_call.1} parent=11 // pred_check
          %p228 = pneg %p89
        $region18: #{tpu_custom_call.1} parent=11 // pred_check_branch
          %230 = sbr.rel (%p228) target = $region20
        $region19: #{tpu_custom_call.1} parent=11 // pred_region
          %232 = vsyncadd [#allocation6], 0
          %s234 = sshll.u32 %s2, 4
          %s235 = int_to_ptr.hbm [resolvable:$true] %s234
          %s236 = sshll.u32 [#allocation7], 4
          %s237 = int_to_ptr.vmem [resolvable:$true] %s236
          %239 = dma.hbm_to_vmem [thread:$0]  %s235, 48, %s237, [#allocation6]
        $region20: #{tpu_custom_call.1} parent=11 // pred_fallthru
          _
        // Predicated region
        $region21: #{tpu_custom_call.1} parent=11 // pred_check
          %p240 = pneg %p110
        $region22: #{tpu_custom_call.1} parent=11 // pred_check_branch
          %242 = sbr.rel (%p240) target = $region24
        $region23: #{tpu_custom_call.1} parent=11 // pred_region
          %244 = vsyncadd [#allocation9], 0
          %s245 = sshll.u32 %s3, 4
          %s246 = int_to_ptr.hbm [resolvable:$true] %s245
          %s247 = sshll.u32 [#allocation8], 4
          %s248 = int_to_ptr.vmem [resolvable:$true] %s247
          %253 = dma.hbm_to_vmem [thread:$0]  %s246, 3072, %s248, [#allocation9], 64, 64, 4
        $region24: #{tpu_custom_call.1} parent=11 // pred_fallthru
          _
        // Predicated region
        $region25: #{tpu_custom_call.1} parent=11 // pred_check
          %p254 = pneg %p131
        $region26: #{tpu_custom_call.1} parent=11 // pred_check_branch
          %256 = sbr.rel (%p254) target = $region28
        $region27: #{tpu_custom_call.1} parent=11 // pred_region
          _
        $region28: #{tpu_custom_call.1} parent=11 // pred_fallthru
          _
        // Predicated region
        $region29: #{tpu_custom_call.1} parent=11 // pred_check
          %p257 = pneg %p152
        $region30: #{tpu_custom_call.1} parent=11 // pred_check_branch
          %259 = sbr.rel (%p257) target = $region32
        $region31: #{tpu_custom_call.1} parent=11 // pred_region
          %261 = vsyncadd [#allocation9], 0
          %s262 = sshll.u32 %s5, 4
          %s263 = int_to_ptr.hbm [resolvable:$true] %s262
          %s264 = sshll.u32 [#allocation10], 4
          %s265 = int_to_ptr.vmem [resolvable:$true] %s264
          %270 = dma.hbm_to_vmem [thread:$0]  %s263, 1024, %s265, [#allocation9], 64, 64, 4
        $region32: #{tpu_custom_call.1} parent=11 // pred_fallthru
          _
        // Predicated region
        $region33: #{tpu_custom_call.1} parent=11 // pred_check
          %p271 = pneg %p173
        $region34: #{tpu_custom_call.1} parent=11 // pred_check_branch
          %273 = sbr.rel (%p271) target = $region36
        $region35: #{tpu_custom_call.1} parent=11 // pred_region
          _
        $region36: #{tpu_custom_call.1} parent=11 // pred_fallthru
          _
      $region12: #{tpu_custom_call.1} parent=5 // pred_fallthru
        _
      %p274 = scmp.lt.s32.totalorder %s21, 2
      // Predicated region
      $region37: #{tpu_custom_call.1} parent=5 // pred_check
        %p275 = pneg %p274
      $region38: #{tpu_custom_call.1} parent=5 // pred_check_branch
        %277 = sbr.rel (%p275) target = $region40
      $region39: #{tpu_custom_call.1} parent=5 // pred_region
        // Predicated region
        $region41: #{tpu_custom_call.1} parent=39 // pred_check
          %p278 = pneg %p41
        $region42: #{tpu_custom_call.1} parent=39 // pred_check_branch
          %280 = sbr.rel (%p278) target = $region44
        $region43: #{tpu_custom_call.1} parent=39 // pred_region
          %s281 = sand.u32 %s31, 1
          %s282 = scalar_lea.sflag [#allocation3], %s281
          %s283 = sand.u32 %s31, 1
          %s284 = smul.addr %s283, 16
          %s285 = scalar_lea.vmem [#allocation2], %s284
          %s286 = smul.u32 4, %s21
          %288 = vsyncadd %s282, 0
          %s289 = smul.addr %s286, 4
          %s290 = scalar_lea.hbm %s0, %s289
          %s291 = sshll.u32 %s290, 4
          %s292 = int_to_ptr.hbm [resolvable:$true] %s291
          %s293 = sshll.u32 %s285, 4
          %s294 = int_to_ptr.vmem [resolvable:$true] %s293
          %299 = dma.hbm_to_vmem [thread:$0]  %s292, 256, %s294, %s282, 64, 64, 4
        $region44: #{tpu_custom_call.1} parent=39 // pred_fallthru
          _
      $region40: #{tpu_custom_call.1} parent=5 // pred_fallthru
        _
      %p300 = scmp.le.s32.totalorder 1, %s21
      %p301 = scmp.lt.s32.totalorder %s21, 3
      %p302 = pnand %p300, %p301
      %p303 = pneg %p302
      // Predicated region
      $region45: #{tpu_custom_call.1} parent=5 // pred_check
        _
      $region46: #{tpu_custom_call.1} parent=5 // pred_check_branch
        %305 = sbr.rel (%p302) target = $region48
      $region47: #{tpu_custom_call.1} parent=5 // pred_region
        %s306 = ssub.s32 %s21, 1
        %s307 = sand.u32 %s34, 1
        %s308 = scalar_lea.sflag [#allocation3], %s307
        %s309 = sand.u32 %s34, 1
        %s310 = smul.addr %s309, 16
        %s311 = scalar_lea.vmem [#allocation2], %s310
        // Predicated region
        $region49: #{tpu_custom_call.1} parent=47 // pred_check
          %p312 = pneg %p47
        $region50: #{tpu_custom_call.1} parent=47 // pred_check_branch
          %314 = sbr.rel (%p312) target = $region52
        $region51: #{tpu_custom_call.1} parent=47 // pred_region
          %316 = dma.done %s308, 256
        $region52: #{tpu_custom_call.1} parent=47 // pred_fallthru
          _
        // Predicated region
        $region53: #{tpu_custom_call.1} parent=47 // pred_check
          %p317 = pneg %p68
        $region54: #{tpu_custom_call.1} parent=47 // pred_check_branch
          %319 = sbr.rel (%p317) target = $region56
        $region55: #{tpu_custom_call.1} parent=47 // pred_region
          %321 = dma.done [#allocation6], 3072
        $region56: #{tpu_custom_call.1} parent=47 // pred_fallthru
          _
        // Predicated region
        $region57: #{tpu_custom_call.1} parent=47 // pred_check
          %p322 = pneg %p89
        $region58: #{tpu_custom_call.1} parent=47 // pred_check_branch
          %324 = sbr.rel (%p322) target = $region60
        $region59: #{tpu_custom_call.1} parent=47 // pred_region
          %326 = dma.done [#allocation6], 48
        $region60: #{tpu_custom_call.1} parent=47 // pred_fallthru
          _
        // Predicated region
        $region61: #{tpu_custom_call.1} parent=47 // pred_check
          %p327 = pneg %p110
        $region62: #{tpu_custom_call.1} parent=47 // pred_check_branch
          %329 = sbr.rel (%p327) target = $region64
        $region63: #{tpu_custom_call.1} parent=47 // pred_region
          %331 = dma.done [#allocation9], 3072
        $region64: #{tpu_custom_call.1} parent=47 // pred_fallthru
          _
        // Predicated region
        $region65: #{tpu_custom_call.1} parent=47 // pred_check
          %p332 = pneg %p152
        $region66: #{tpu_custom_call.1} parent=47 // pred_check_branch
          %334 = sbr.rel (%p332) target = $region68
        $region67: #{tpu_custom_call.1} parent=47 // pred_region
          %336 = dma.done [#allocation9], 1024
        $region68: #{tpu_custom_call.1} parent=47 // pred_fallthru
          _
        %s337 = sand.u32 %s34, 1
        %s338 = scalar_lea.sflag [#allocation3], %s337
        %s339 = sand.u32 %s34, 1
        %s340 = smul.addr %s339, 16
        %s341 = scalar_lea.vmem [#allocation2], %s340
        %p342 = pneg %p47
        %p343 = pneg %p44
        %p344 = pneg %p68
        %p345 = pneg %p65
        %p346 = pneg %p89
        %p347 = pneg %p86
        %p348 = pneg %p110
        %p349 = pneg %p107
        %p350 = pneg %p131
        %p351 = pneg %p128
        %p352 = pneg %p152
        %p353 = pneg %p149
        %p354 = pneg %p173
        %p355 = pneg %p170
        %p356 = pneg %p199
        %p357 = pneg %p196
        %s358 = sand.u32 %s186, 1
        %s359 = scalar_lea.sflag [#allocation4], %s358
        %s360 = sand.u32 %s186, 1
        %s361 = smul.addr %s360, 32
        %s362 = scalar_lea.vmem [#allocation11], %s361
        %s363 = smul.u32 4, %s26
        %s364 = smul.u32 4, %s26
        %v365 = vld [vmem:[%s311] sm:$0xf]
        %v366 = vld [vmem:[%s311 + $0x4] sm:$0xf]
        %v367 = vld [vmem:[%s311 + $0x8] sm:$0xf]
        %v368 = vld [vmem:[%s311 + $0xc] sm:$0xf]
        %v369 = vld [vmem:[#allocation5] sm:$0xff]
        %v370 = vld [vmem:[#allocation5 + $0x8] sm:$0xf]
        %v371 = vld [vmem:[#allocation5 + $0xc] sm:$0xff]
        %v372 = vld [vmem:[#allocation5 + $0x14] sm:$0xf]
        %v373 = vld [vmem:[#allocation5 + $0x18] sm:$0xff]
        %v374 = vld [vmem:[#allocation5 + $0x20] sm:$0xf]
        %v375 = vld [vmem:[#allocation5 + $0x24] sm:$0xff]
        %v376 = vld [vmem:[#allocation5 + $0x2c] sm:$0xf]
        %v377 = vld [vmem:[#allocation5 + $0x30] sm:$0xff]
        %v378 = vld [vmem:[#allocation5 + $0x38] sm:$0xf]
        %v379 = vld [vmem:[#allocation5 + $0x3c] sm:$0xff]
        %v380 = vld [vmem:[#allocation5 + $0x44] sm:$0xf]
        %v381 = vld [vmem:[#allocation5 + $0x48] sm:$0xff]
        %v382 = vld [vmem:[#allocation5 + $0x50] sm:$0xf]
        %v383 = vld [vmem:[#allocation5 + $0x54] sm:$0xff]
        %v384 = vld [vmem:[#allocation5 + $0x5c] sm:$0xf]
        %v385 = vld [vmem:[#allocation5 + $0x60] sm:$0xff]
        %v386 = vld [vmem:[#allocation5 + $0x68] sm:$0xf]
        %v387 = vld [vmem:[#allocation5 + $0x6c] sm:$0xff]
        %v388 = vld [vmem:[#allocation5 + $0x74] sm:$0xf]
        %v389 = vld [vmem:[#allocation5 + $0x78] sm:$0xff]
        %v390 = vld [vmem:[#allocation5 + $0x80] sm:$0xf]
        %v391 = vld [vmem:[#allocation5 + $0x84] sm:$0xff]
        %v392 = vld [vmem:[#allocation5 + $0x8c] sm:$0xf]
        %v393 = vld [vmem:[#allocation5 + $0x90] sm:$0xff]
        %v394 = vld [vmem:[#allocation5 + $0x98] sm:$0xf]
        %v395 = vld [vmem:[#allocation5 + $0x9c] sm:$0xff]
        %v396 = vld [vmem:[#allocation5 + $0xa4] sm:$0xf]
        %v397 = vld [vmem:[#allocation5 + $0xa8] sm:$0xff]
        %v398 = vld [vmem:[#allocation5 + $0xb0] sm:$0xf]
        %v399 = vld [vmem:[#allocation5 + $0xb4] sm:$0xff]
        %v400 = vld [vmem:[#allocation5 + $0xbc] sm:$0xf]
        %v401 = vld [vmem:[#allocation7] sm:$0x7]
        %v403 = vperm.slane %v401, 0
        %v404 = vperm.slane %v401, 1
        %v405 = vperm.slane %v401, 2
        %v413 = vunpack.c.l.b16 %v365
        %v414 = vunpack.c.l.b16 %v366
        %v415 = vunpack.c.l.b16 %v367
        %v416 = vunpack.c.l.b16 %v368
        %v417 = vpack.c.b16 %v414, %v413
        %v418 = vpack.c.b16 %v416, %v415
        %v453 = vunpack.c.l.b16 %v369
        %v454 = vunpack.c.h.b16 %v369
        %v455 = vunpack.c.l.b16 %v370
        %v456 = vunpack.c.l.b16 %v371
        %v457 = vunpack.c.h.b16 %v371
        %v458 = vunpack.c.l.b16 %v372
        %v459 = vunpack.c.l.b16 %v373
        %v460 = vunpack.c.h.b16 %v373
        %v461 = vunpack.c.l.b16 %v374
        %v462 = vunpack.c.l.b16 %v375
        %v463 = vunpack.c.h.b16 %v375
        %v464 = vunpack.c.l.b16 %v376
        %v465 = vunpack.c.l.b16 %v377
        %v466 = vunpack.c.h.b16 %v377
        %v467 = vunpack.c.l.b16 %v378
        %v468 = vunpack.c.l.b16 %v379
        %v469 = vunpack.c.h.b16 %v379
        %v470 = vunpack.c.l.b16 %v380
        %v471 = vunpack.c.l.b16 %v381
        %v472 = vunpack.c.h.b16 %v381
        %v473 = vunpack.c.l.b16 %v382
        %v474 = vunpack.c.l.b16 %v383
        %v475 = vunpack.c.h.b16 %v383
        %v476 = vunpack.c.l.b16 %v384
        %v477 = vunpack.c.l.b16 %v385
        %v478 = vunpack.c.h.b16 %v385
        %v479 = vunpack.c.l.b16 %v386
        %v480 = vunpack.c.l.b16 %v387
        %v481 = vunpack.c.h.b16 %v387
        %v482 = vunpack.c.l.b16 %v388
        %v483 = vunpack.c.l.b16 %v389
        %v484 = vunpack.c.h.b16 %v389
        %v485 = vunpack.c.l.b16 %v390
        %v486 = vunpack.c.l.b16 %v391
        %v487 = vunpack.c.h.b16 %v391
        %v488 = vunpack.c.l.b16 %v392
        %v489 = vunpack.c.l.b16 %v393
        %v490 = vunpack.c.h.b16 %v393
        %v491 = vunpack.c.l.b16 %v394
        %v492 = vunpack.c.l.b16 %v395
        %v493 = vunpack.c.h.b16 %v395
        %v494 = vunpack.c.l.b16 %v396
        %v495 = vunpack.c.l.b16 %v397
        %v496 = vunpack.c.h.b16 %v397
        %v497 = vunpack.c.l.b16 %v398
        %v498 = vunpack.c.l.b16 %v399
        %v499 = vunpack.c.h.b16 %v399
        %v500 = vunpack.c.l.b16 %v400
        %v501 = vpack.c.b16 %v456, %v453
        %v502 = vpack.c.b16 %v457, %v454
        %v503 = vpack.c.b16 %v458, %v455
        %v504 = vpack.c.b16 %v462, %v459
        %v505 = vpack.c.b16 %v463, %v460
        %v506 = vpack.c.b16 %v464, %v461
        %v507 = vpack.c.b16 %v468, %v465
        %v508 = vpack.c.b16 %v469, %v466
        %v509 = vpack.c.b16 %v470, %v467
        %v510 = vpack.c.b16 %v474, %v471
        %v511 = vpack.c.b16 %v475, %v472
        %v512 = vpack.c.b16 %v476, %v473
        %v513 = vpack.c.b16 %v480, %v477
        %v514 = vpack.c.b16 %v481, %v478
        %v515 = vpack.c.b16 %v482, %v479
        %v516 = vpack.c.b16 %v486, %v483
        %v517 = vpack.c.b16 %v487, %v484
        %v518 = vpack.c.b16 %v488, %v485
        %v519 = vpack.c.b16 %v492, %v489
        %v520 = vpack.c.b16 %v493, %v490
        %v521 = vpack.c.b16 %v494, %v491
        %v522 = vpack.c.b16 %v498, %v495
        %v523 = vpack.c.b16 %v499, %v496
        %v524 = vpack.c.b16 %v500, %v497
        %549 = vmatpush.bf16.msra.mxu0 %v522
        %550 = vmatpush.bf16.msra.mxu0 %v519
        %551 = vmatpush.bf16.msra.mxu0 %v516
        %552 = vmatpush.bf16.msra.mxu0 %v513
        %553 = vmatpush.bf16.msra.mxu0 %v510
        %554 = vmatpush.bf16.msra.mxu0 %v507
        %555 = vmatpush.bf16.msra.mxu0 %v504
        %556 = vmatpush.bf16.msra.mxu0 %v501
        %557 = vmatmul.bf16.gmra.mxu0 %v417
        %v558 = vpop.f32.mrf.mxu0
        %v559 = vadd.f32 %v403, %v558
        %v560 = vpop.f32.mrf.mxu0
        %v561 = vadd.f32 %v403, %v560
        %562 = vmatmul.bf16.gmra.mxu0 %v418
        %v563 = vpop.f32.mrf.mxu0
        %v564 = vadd.f32 %v403, %v563
        %v565 = vpop.f32.mrf.mxu0
        %v566 = vadd.f32 %v403, %v565
        %567 = vdwg.mxu0
        %568 = vmatpush.bf16.msra.mxu0 %v523
        %569 = vmatpush.bf16.msra.mxu0 %v520
        %570 = vmatpush.bf16.msra.mxu0 %v517
        %571 = vmatpush.bf16.msra.mxu0 %v514
        %572 = vmatpush.bf16.msra.mxu0 %v511
        %573 = vmatpush.bf16.msra.mxu0 %v508
        %574 = vmatpush.bf16.msra.mxu0 %v505
        %575 = vmatpush.bf16.msra.mxu0 %v502
        %576 = vmatmul.bf16.gmra.mxu0 %v417
        %v577 = vpop.f32.mrf.mxu0
        %v578 = vadd.f32 %v404, %v577
        %v579 = vpop.f32.mrf.mxu0
        %v580 = vadd.f32 %v404, %v579
        %581 = vmatmul.bf16.gmra.mxu0 %v418
        %v582 = vpop.f32.mrf.mxu0
        %v583 = vadd.f32 %v404, %v582
        %v584 = vpop.f32.mrf.mxu0
        %v585 = vadd.f32 %v404, %v584
        %586 = vdwg.mxu0
        %587 = vmatpush.bf16.msra.mxu0 %v524
        %588 = vmatpush.bf16.msra.mxu0 %v521
        %589 = vmatpush.bf16.msra.mxu0 %v518
        %590 = vmatpush.bf16.msra.mxu0 %v515
        %591 = vmatpush.bf16.msra.mxu0 %v512
        %592 = vmatpush.bf16.msra.mxu0 %v509
        %593 = vmatpush.bf16.msra.mxu0 %v506
        %594 = vmatpush.bf16.msra.mxu0 %v503
        %595 = vmatmul.bf16.gmra.mxu0 %v417
        %v596 = vpop.f32.mrf.mxu0
        %v597 = vadd.f32 %v405, %v596
        %v598 = vpop.f32.mrf.mxu0
        %v599 = vadd.f32 %v405, %v598
        %600 = vmatmul.bf16.gmra.mxu0 %v418
        %v601 = vpop.f32.mrf.mxu0
        %v602 = vadd.f32 %v405, %v601
        %v603 = vpop.f32.mrf.mxu0
        %v604 = vadd.f32 %v405, %v603
        %605 = vdwg.mxu0
        %v606 = vmax.f32 %v559, 0.0
        %v607 = vmax.f32 %v578, 0.0
        %v608 = vmax.f32 %v597, 0.0
        %v609 = vmax.f32 %v561, 0.0
        %v610 = vmax.f32 %v580, 0.0
        %v611 = vmax.f32 %v599, 0.0
        %v612 = vmax.f32 %v564, 0.0
        %v613 = vmax.f32 %v583, 0.0
        %v614 = vmax.f32 %v602, 0.0
        %v615 = vmax.f32 %v566, 0.0
        %v616 = vmax.f32 %v585, 0.0
        %v617 = vmax.f32 %v604, 0.0
        %v618 = vpack.c.bf16 %v609, %v606
        %v619 = vpack.c.bf16 %v610, %v607
        %v620 = vpack.c.bf16 %v611, %v608
        %v621 = vpack.c.bf16 %v615, %v612
        %v622 = vpack.c.bf16 %v616, %v613
        %v623 = vpack.c.bf16 %v617, %v614
        %v624 = vld [vmem:[#allocation8] sm:$0xf]
        %v625 = vld [vmem:[#allocation8 + $0x4] sm:$0xf]
        %v626 = vld [vmem:[#allocation8 + $0x8] sm:$0xf]
        %v627 = vld [vmem:[#allocation8 + $0xc] sm:$0xf]
        %v628 = vld [vmem:[#allocation8 + $0x10] sm:$0xf]
        %v629 = vld [vmem:[#allocation8 + $0x14] sm:$0xf]
        %v630 = vld [vmem:[#allocation8 + $0x18] sm:$0xf]
        %v631 = vld [vmem:[#allocation8 + $0x1c] sm:$0xf]
        %v632 = vld [vmem:[#allocation8 + $0x20] sm:$0xf]
        %v633 = vld [vmem:[#allocation8 + $0x24] sm:$0xf]
        %v634 = vld [vmem:[#allocation8 + $0x28] sm:$0xf]
        %v635 = vld [vmem:[#allocation8 + $0x2c] sm:$0xf]
        %v636 = vld [vmem:[#allocation8 + $0x30] sm:$0xf]
        %v637 = vld [vmem:[#allocation8 + $0x34] sm:$0xf]
        %v638 = vld [vmem:[#allocation8 + $0x38] sm:$0xf]
        %v639 = vld [vmem:[#allocation8 + $0x3c] sm:$0xf]
        %v640 = vld [vmem:[#allocation8 + $0x40] sm:$0xf]
        %v641 = vld [vmem:[#allocation8 + $0x44] sm:$0xf]
        %v642 = vld [vmem:[#allocation8 + $0x48] sm:$0xf]
        %v643 = vld [vmem:[#allocation8 + $0x4c] sm:$0xf]
        %v644 = vld [vmem:[#allocation8 + $0x50] sm:$0xf]
        %v645 = vld [vmem:[#allocation8 + $0x54] sm:$0xf]
        %v646 = vld [vmem:[#allocation8 + $0x58] sm:$0xf]
        %v647 = vld [vmem:[#allocation8 + $0x5c] sm:$0xf]
        %v648 = vld [vmem:[#allocation8 + $0x60] sm:$0xf]
        %v649 = vld [vmem:[#allocation8 + $0x64] sm:$0xf]
        %v650 = vld [vmem:[#allocation8 + $0x68] sm:$0xf]
        %v651 = vld [vmem:[#allocation8 + $0x6c] sm:$0xf]
        %v652 = vld [vmem:[#allocation8 + $0x70] sm:$0xf]
        %v653 = vld [vmem:[#allocation8 + $0x74] sm:$0xf]
        %v654 = vld [vmem:[#allocation8 + $0x78] sm:$0xf]
        %v655 = vld [vmem:[#allocation8 + $0x7c] sm:$0xf]
        %v656 = vld [vmem:[#allocation8 + $0x80] sm:$0xf]
        %v657 = vld [vmem:[#allocation8 + $0x84] sm:$0xf]
        %v658 = vld [vmem:[#allocation8 + $0x88] sm:$0xf]
        %v659 = vld [vmem:[#allocation8 + $0x8c] sm:$0xf]
        %v660 = vld [vmem:[#allocation8 + $0x90] sm:$0xf]
        %v661 = vld [vmem:[#allocation8 + $0x94] sm:$0xf]
        %v662 = vld [vmem:[#allocation8 + $0x98] sm:$0xf]
        %v663 = vld [vmem:[#allocation8 + $0x9c] sm:$0xf]
        %v664 = vld [vmem:[#allocation8 + $0xa0] sm:$0xf]
        %v665 = vld [vmem:[#allocation8 + $0xa4] sm:$0xf]
        %v666 = vld [vmem:[#allocation8 + $0xa8] sm:$0xf]
        %v667 = vld [vmem:[#allocation8 + $0xac] sm:$0xf]
        %v668 = vld [vmem:[#allocation8 + $0xb0] sm:$0xf]
        %v669 = vld [vmem:[#allocation8 + $0xb4] sm:$0xf]
        %v670 = vld [vmem:[#allocation8 + $0xb8] sm:$0xf]
        %v671 = vld [vmem:[#allocation8 + $0xbc] sm:$0xf]
        %v672 = vld [vmem:[%s4] sm:$0x1]
        %v674 = vperm.slane %v672, 0
        %v724 = vunpack.c.l.b16 %v624
        %v725 = vunpack.c.l.b16 %v625
        %v726 = vunpack.c.l.b16 %v626
        %v727 = vunpack.c.l.b16 %v627
        %v728 = vunpack.c.l.b16 %v628
        %v729 = vunpack.c.l.b16 %v629
        %v730 = vunpack.c.l.b16 %v630
        %v731 = vunpack.c.l.b16 %v631
        %v732 = vunpack.c.l.b16 %v632
        %v733 = vunpack.c.l.b16 %v633
        %v734 = vunpack.c.l.b16 %v634
        %v735 = vunpack.c.l.b16 %v635
        %v736 = vunpack.c.l.b16 %v636
        %v737 = vunpack.c.l.b16 %v637
        %v738 = vunpack.c.l.b16 %v638
        %v739 = vunpack.c.l.b16 %v639
        %v740 = vunpack.c.l.b16 %v640
        %v741 = vunpack.c.l.b16 %v641
        %v742 = vunpack.c.l.b16 %v642
        %v743 = vunpack.c.l.b16 %v643
        %v744 = vunpack.c.l.b16 %v644
        %v745 = vunpack.c.l.b16 %v645
        %v746 = vunpack.c.l.b16 %v646
        %v747 = vunpack.c.l.b16 %v647
        %v748 = vunpack.c.l.b16 %v648
        %v749 = vunpack.c.l.b16 %v649
        %v750 = vunpack.c.l.b16 %v650
        %v751 = vunpack.c.l.b16 %v651
        %v752 = vunpack.c.l.b16 %v652
        %v753 = vunpack.c.l.b16 %v653
        %v754 = vunpack.c.l.b16 %v654
        %v755 = vunpack.c.l.b16 %v655
        %v756 = vunpack.c.l.b16 %v656
        %v757 = vunpack.c.l.b16 %v657
        %v758 = vunpack.c.l.b16 %v658
        %v759 = vunpack.c.l.b16 %v659
        %v760 = vunpack.c.l.b16 %v660
        %v761 = vunpack.c.l.b16 %v661
        %v762 = vunpack.c.l.b16 %v662
        %v763 = vunpack.c.l.b16 %v663
        %v764 = vunpack.c.l.b16 %v664
        %v765 = vunpack.c.l.b16 %v665
        %v766 = vunpack.c.l.b16 %v666
        %v767 = vunpack.c.l.b16 %v667
        %v768 = vunpack.c.l.b16 %v668
        %v769 = vunpack.c.l.b16 %v669
        %v770 = vunpack.c.l.b16 %v670
        %v771 = vunpack.c.l.b16 %v671
        %v772 = vpack.c.b16 %v725, %v724
        %v773 = vpack.c.b16 %v727, %v726
        %v774 = vpack.c.b16 %v729, %v728
        %v775 = vpack.c.b16 %v731, %v730
        %v776 = vpack.c.b16 %v733, %v732
        %v777 = vpack.c.b16 %v735, %v734
        %v778 = vpack.c.b16 %v737, %v736
        %v779 = vpack.c.b16 %v739, %v738
        %v780 = vpack.c.b16 %v741, %v740
        %v781 = vpack.c.b16 %v743, %v742
        %v782 = vpack.c.b16 %v745, %v744
        %v783 = vpack.c.b16 %v747, %v746
        %v784 = vpack.c.b16 %v749, %v748
        %v785 = vpack.c.b16 %v751, %v750
        %v786 = vpack.c.b16 %v753, %v752
        %v787 = vpack.c.b16 %v755, %v754
        %v788 = vpack.c.b16 %v757, %v756
        %v789 = vpack.c.b16 %v759, %v758
        %v790 = vpack.c.b16 %v761, %v760
        %v791 = vpack.c.b16 %v763, %v762
        %v792 = vpack.c.b16 %v765, %v764
        %v793 = vpack.c.b16 %v767, %v766
        %v794 = vpack.c.b16 %v769, %v768
        %v795 = vpack.c.b16 %v771, %v770
        %820 = vmatpush.bf16.msra.mxu0 %v779
        %821 = vmatpush.bf16.msra.mxu0 %v778
        %822 = vmatpush.bf16.msra.mxu0 %v777
        %823 = vmatpush.bf16.msra.mxu0 %v776
        %824 = vmatpush.bf16.msra.mxu0 %v775
        %825 = vmatpush.bf16.msra.mxu0 %v774
        %826 = vmatpush.bf16.msra.mxu0 %v773
        %827 = vmatpush.bf16.msra.mxu0 %v772
        %828 = vmatmul.bf16.gmra.mxu0 %v618
        %v829 = vpop.f32.mrf.mxu0
        %v830 = vadd.f32 %v674, %v829
        %v831 = vpop.f32.mrf.mxu0
        %v832 = vadd.f32 %v674, %v831
        %833 = vmatmul.bf16.gmra.mxu0 %v621
        %v834 = vpop.f32.mrf.mxu0
        %v835 = vadd.f32 %v674, %v834
        %v836 = vpop.f32.mrf.mxu0
        %v837 = vadd.f32 %v674, %v836
        %838 = vdwg.mxu0
        %839 = vmatpush.bf16.msra.mxu0 %v787
        %840 = vmatpush.bf16.msra.mxu0 %v786
        %841 = vmatpush.bf16.msra.mxu0 %v785
        %842 = vmatpush.bf16.msra.mxu0 %v784
        %843 = vmatpush.bf16.msra.mxu0 %v783
        %844 = vmatpush.bf16.msra.mxu0 %v782
        %845 = vmatpush.bf16.msra.mxu0 %v781
        %846 = vmatpush.bf16.msra.mxu0 %v780
        %847 = vmatmul.bf16.gmra.mxu0 %v619
        %v848 = vpop.f32.mrf.mxu0
        %v849 = vadd.f32 %v830, %v848
        %v850 = vpop.f32.mrf.mxu0
        %v851 = vadd.f32 %v832, %v850
        %852 = vmatmul.bf16.gmra.mxu0 %v622
        %v853 = vpop.f32.mrf.mxu0
        %v854 = vadd.f32 %v835, %v853
        %v855 = vpop.f32.mrf.mxu0
        %v856 = vadd.f32 %v837, %v855
        %857 = vdwg.mxu0
        %858 = vmatpush.bf16.msra.mxu0 %v795
        %859 = vmatpush.bf16.msra.mxu0 %v794
        %860 = vmatpush.bf16.msra.mxu0 %v793
        %861 = vmatpush.bf16.msra.mxu0 %v792
        %862 = vmatpush.bf16.msra.mxu0 %v791
        %863 = vmatpush.bf16.msra.mxu0 %v790
        %864 = vmatpush.bf16.msra.mxu0 %v789
        %865 = vmatpush.bf16.msra.mxu0 %v788
        %866 = vmatmul.bf16.gmra.mxu0 %v620
        %v867 = vpop.f32.mrf.mxu0
        %v868 = vadd.f32 %v849, %v867
        %v869 = vpop.f32.mrf.mxu0
        %v870 = vadd.f32 %v851, %v869
        %871 = vmatmul.bf16.gmra.mxu0 %v623
        %v872 = vpop.f32.mrf.mxu0
        %v873 = vadd.f32 %v854, %v872
        %v874 = vpop.f32.mrf.mxu0
        %v875 = vadd.f32 %v856, %v874
        %876 = vdwg.mxu0
        %v877 = vmax.f32 %v868, 0.0
        %v878 = vmax.f32 %v870, 0.0
        %v879 = vmax.f32 %v873, 0.0
        %v880 = vmax.f32 %v875, 0.0
        %v881 = vpack.c.bf16 %v878, %v877
        %v882 = vpack.c.bf16 %v880, %v879
        %v883 = vld [vmem:[#allocation10] sm:$0xf]
        %v884 = vld [vmem:[#allocation10 + $0x4] sm:$0xf]
        %v885 = vld [vmem:[#allocation10 + $0x8] sm:$0xf]
        %v886 = vld [vmem:[#allocation10 + $0xc] sm:$0xf]
        %v887 = vld [vmem:[#allocation10 + $0x10] sm:$0xf]
        %v888 = vld [vmem:[#allocation10 + $0x14] sm:$0xf]
        %v889 = vld [vmem:[#allocation10 + $0x18] sm:$0xf]
        %v890 = vld [vmem:[#allocation10 + $0x1c] sm:$0xf]
        %v891 = vld [vmem:[#allocation10 + $0x20] sm:$0xf]
        %v892 = vld [vmem:[#allocation10 + $0x24] sm:$0xf]
        %v893 = vld [vmem:[#allocation10 + $0x28] sm:$0xf]
        %v894 = vld [vmem:[#allocation10 + $0x2c] sm:$0xf]
        %v895 = vld [vmem:[#allocation10 + $0x30] sm:$0xf]
        %v896 = vld [vmem:[#allocation10 + $0x34] sm:$0xf]
        %v897 = vld [vmem:[#allocation10 + $0x38] sm:$0xf]
        %v898 = vld [vmem:[#allocation10 + $0x3c] sm:$0xf]
        %v899 = vld [vmem:[%s6] sm:$0x1]
        %v901 = vperm.slane %v899, 0
        %v919 = vunpack.c.l.b16 %v883
        %v920 = vunpack.c.l.b16 %v884
        %v921 = vunpack.c.l.b16 %v885
        %v922 = vunpack.c.l.b16 %v886
        %v923 = vunpack.c.l.b16 %v887
        %v924 = vunpack.c.l.b16 %v888
        %v925 = vunpack.c.l.b16 %v889
        %v926 = vunpack.c.l.b16 %v890
        %v927 = vunpack.c.l.b16 %v891
        %v928 = vunpack.c.l.b16 %v892
        %v929 = vunpack.c.l.b16 %v893
        %v930 = vunpack.c.l.b16 %v894
        %v931 = vunpack.c.l.b16 %v895
        %v932 = vunpack.c.l.b16 %v896
        %v933 = vunpack.c.l.b16 %v897
        %v934 = vunpack.c.l.b16 %v898
        %v935 = vpack.c.b16 %v920, %v919
        %v936 = vpack.c.b16 %v922, %v921
        %v937 = vpack.c.b16 %v924, %v923
        %v938 = vpack.c.b16 %v926, %v925
        %v939 = vpack.c.b16 %v928, %v927
        %v940 = vpack.c.b16 %v930, %v929
        %v941 = vpack.c.b16 %v932, %v931
        %v942 = vpack.c.b16 %v934, %v933
        %951 = vmatpush.bf16.msra.mxu0 %v942
        %952 = vmatpush.bf16.msra.mxu0 %v941
        %953 = vmatpush.bf16.msra.mxu0 %v940
        %954 = vmatpush.bf16.msra.mxu0 %v939
        %955 = vmatpush.bf16.msra.mxu0 %v938
        %956 = vmatpush.bf16.msra.mxu0 %v937
        %957 = vmatpush.bf16.msra.mxu0 %v936
        %958 = vmatpush.bf16.msra.mxu0 %v935
        %959 = vmatmul.bf16.gmra.mxu0 %v881
        %v960 = vpop.f32.mrf.mxu0
        %v961 = vadd.f32 %v901, %v960
        %v962 = vpop.f32.mrf.mxu0
        %v963 = vadd.f32 %v901, %v962
        %964 = vmatmul.bf16.gmra.mxu0 %v882
        %v965 = vpop.f32.mrf.mxu0
        %v966 = vadd.f32 %v901, %v965
        %v967 = vpop.f32.mrf.mxu0
        %v968 = vadd.f32 %v901, %v967
        %969 = vdwg.mxu0
        %970 = vst [vmem:[%s362] sm:$0xff] %v961
        %971 = vst [vmem:[%s362 + $0x8] sm:$0xff] %v963
        %972 = vst [vmem:[%s362 + $0x10] sm:$0xff] %v966
        %973 = vst [vmem:[%s362 + $0x18] sm:$0xff] %v968
        %s974 = sand.u32 %s186, 1
        %s975 = scalar_lea.sflag [#allocation4], %s974
        %s976 = sand.u32 %s186, 1
        %s977 = smul.addr %s976, 32
        %s978 = scalar_lea.vmem [#allocation11], %s977
        // Predicated region
        $region69: #{tpu_custom_call.1} parent=47 // pred_check
          %p979 = pneg %p196
        $region70: #{tpu_custom_call.1} parent=47 // pred_check_branch
          %981 = sbr.rel (%p979) target = $region72
        $region71: #{tpu_custom_call.1} parent=47 // pred_region
          %s982 = smul.u32 4, %s26
          %984 = vsyncadd %s975, 0
          %s985 = smul.addr %s982, 8
          %s986 = scalar_lea.hbm %s7, %s985
          %s987 = sshll.u32 %s978, 4
          %s988 = int_to_ptr.vmem [resolvable:$true] %s987
          %s989 = sshll.u32 %s986, 4
          %s990 = int_to_ptr.hbm [resolvable:$true] %s989
          %995 = dma.vmem_to_hbm [thread:$0]  %s988, 512, %s990, %s975, 128, 128, 8
        $region72: #{tpu_custom_call.1} parent=47 // pred_fallthru
          _
      $region48: #{tpu_custom_call.1} parent=5 // pred_fallthru
        _
      %p996 = scmp.le.s32.totalorder 2, %s21
      // Predicated region
      $region73: #{tpu_custom_call.1} parent=5 // pred_check
        %p997 = pneg %p996
      $region74: #{tpu_custom_call.1} parent=5 // pred_check_branch
        %999 = sbr.rel (%p997) target = $region76
      $region75: #{tpu_custom_call.1} parent=5 // pred_region
        %s1000 = ssub.s32 %s21, 2
        // Predicated region
        $region77: #{tpu_custom_call.1} parent=75 // pred_check
          %p1001 = pneg %p202
        $region78: #{tpu_custom_call.1} parent=75 // pred_check_branch
          %1003 = sbr.rel (%p1001) target = $region80
        $region79: #{tpu_custom_call.1} parent=75 // pred_region
          %s1004 = sand.u32 %s187, 1
          %s1005 = scalar_lea.sflag [#allocation4], %s1004
          %s1006 = sand.u32 %s187, 1
          %s1007 = smul.addr %s1006, 32
          %s1008 = scalar_lea.vmem [#allocation11], %s1007
          %1010 = dma.done %s1005, 512
        $region80: #{tpu_custom_call.1} parent=75 // pred_fallthru
          _
      $region76: #{tpu_custom_call.1} parent=5 // pred_fallthru
        _
    $region6: #{tpu_custom_call.1} parent=1 // loop_footer
      %s25 = sadd.s32 1, %s21
    $region7: #{tpu_custom_call.1} parent=1 // loop_footer_branch
      %20 = sbr.rel target = $region3
    $region8: #{tpu_custom_call.1} parent=1 // loop_exit
      _
    %1011 = vsyncpa [#allocation3], 1
    %s1012 = scalar_lea.sflag [#allocation3], 1
    %1013 = vsyncpa %s1012, 1
    %1014 = vsyncpa [#allocation6], 1
    %1015 = vsyncpa [#allocation9], 1
    %1016 = vsyncpa [#allocation4], 1
    %s1017 = scalar_lea.sflag [#allocation4], 1
    %1018 = vsyncpa %s1017, 1

</llo_original>
